<compile_context>
chip_gen: v7x
topology: tpu7x:2x2x1
jax: 0.10.0
libtpu: 0.0.40
codegen_flags: <defaults>
</compile_context>

<pallas_src>
import functools

import jax
import jax.numpy as jnp
from jax.experimental import pallas as pl
from jax.experimental.pallas import tpu as pltpu


def _round_up(v, m):
    return ((v + m - 1) // m) * m


def _moe_kernel(x_ref, wc_ref, bc_ref, out_ref, *, gh, num_experts):
    x = x_ref[...].astype(jnp.float32)                               # (TB, D_in)

    # Single fused MXU matmul over [expert | gate | pad] columns.
    fused = jnp.dot(x, wc_ref[...],
                    preferred_element_type=jnp.float32) + bc_ref[...]  # (TB, W)

    # Masked softmax over the gate lanes [gh, gh + num_experts): full-vreg lane
    # math, no narrow lane slices.  Zero-padded lanes are excluded by the mask
    # so they cannot corrupt the softmax.
    col = jax.lax.broadcasted_iota(jnp.int32, fused.shape, 1)
    is_gate = (col >= gh) & (col < gh + num_experts)
    neg_inf = jnp.float32(-jnp.inf)
    m = jnp.max(jnp.where(is_gate, fused, neg_inf), axis=-1, keepdims=True)
    p = jnp.exp(jnp.where(is_gate, fused - m, neg_inf))               # exp(-inf)=0
    denom = jnp.sum(p, axis=-1, keepdims=True)
    # sum_e softmax_e == denom * (1/denom); exact reciprocal keeps 1e-5 tol.
    gate_sum = denom * pl.reciprocal(denom, approx=False)             # (TB, 1)

    # Mixing: sum_e gate_e * expert_out == gate_sum * expert_out.  Gate / pad
    # lanes get multiplied too but are sliced off in the wrapper, so the store
    # stays lane-dense (full 128 lanes, unmasked vst).
    out_ref[...] = (gate_sum * fused).astype(out_ref.dtype)


def prepare_fused_params(gate_w, gate_b, expert_w, expert_b, *,
                         num_groups, experts_per_group, hidden_size,
                         lane=128):
    """Run ONCE at parameter-load time (hoisted off the per-forward path).

    gate_w: (D_in, E); gate_b: (E,); expert_w: (E, D_in, H); expert_b: (E, H).
    Returns (w_c, b_c) with last-axis layout:
        [ GH pre-summed expert columns | E gate columns | zero pad to width ].
    """
    D_in, E = gate_w.shape
    GH = num_groups * hidden_size
    width = _round_up(GH + E, lane)

    # Per-group sum of expert Linears (exact by linearity of nn.Linear).
    w_grp = expert_w.reshape(num_groups, experts_per_group, D_in,
                             hidden_size).sum(axis=1)                  # (G, D_in, H)
    w_exp = jnp.transpose(w_grp, (1, 0, 2)).reshape(D_in, GH)          # (D_in, GH)
    b_exp = expert_b.reshape(num_groups, experts_per_group,
                             hidden_size).sum(axis=1).reshape(GH)

    w_c = jnp.zeros((D_in, width), dtype=jnp.float32)
    w_c = w_c.at[:, :GH].set(w_exp).at[:, GH:GH + E].set(gate_w)
    b_c = jnp.zeros((1, width), dtype=jnp.float32)
    b_c = b_c.at[:, :GH].set(b_exp).at[:, GH:GH + E].set(gate_b)
    return w_c, b_c


def nested_moe_forward(x, w_c, b_c, *, num_groups, experts_per_group,
                       hidden_size, block_b=256):
    """x: (B, D_in); (w_c, b_c) from prepare_fused_params. Returns (B, G*H)."""
    B, D_in = x.shape
    E = num_groups * experts_per_group
    GH = num_groups * hidden_size
    width = w_c.shape[1]

    # Batch tile: multiple of 8 sublanes; split into >=2 tiles when possible so
    # the ("parallel",) grid axis shards across v7x's two TensorCores.
    tb = min(block_b, max(8, _round_up(pl.cdiv(B, 2), 8)))
    grid = (pl.cdiv(B, tb),)   # ragged last block handled by Pallas (no x pad)

    # VMEM budget: resident weights + double-buffered x / out tiles (v7x-safe).
    itm = 4  # f32 bytes
    weight_bytes = (w_c.size + b_c.size) * itm
    tile_bytes = (tb * D_in + tb * width) * itm
    vmem_limit = int(min(128 * 1024 * 1024,
                         max(4 * 1024 * 1024,
                             2 * weight_bytes + 2 * tile_bytes + (1 << 20))))

    cost = pl.CostEstimate(
        flops=int(2 * B * D_in * width + 6 * B * width),
        transcendentals=int(B * width),
        bytes_accessed=int(itm * (x.size + w_c.size + b_c.size + B * width)),
    )

    kernel = functools.partial(_moe_kernel, gh=GH, num_experts=E)

    # TODO(synk): for large GH add a second grid axis tiling output columns
    # (tn=256-512; 128 on v5e), compute gate_sum only at j==0 into a VMEM
    # scratch, and single-buffer the constant-index weight specs
    # (pipeline_mode=pl.Buffered(1)) to halve resident-weight VMEM on v7x.
    # TODO(synk): at production sizes cast x / w_c to bf16 (keep f32 accum and
    # f32 elementwise on v5e); f32 kept here so the 1e-5 reference check holds.
    out = pl.pallas_call(
        kernel,
        out_shape=jax.ShapeDtypeStruct((B, width), x.dtype),
        grid_spec=pltpu.PrefetchScalarGridSpec(
            num_scalar_prefetch=0,
            grid=grid,
            in_specs=[
                pl.BlockSpec((tb, D_in), lambda i: (i, 0)),      # x batch tile
                pl.BlockSpec((D_in, width), lambda i: (0, 0)),   # fused W (resident)
                pl.BlockSpec((1, width), lambda i: (0, 0)),      # fused bias
            ],
            out_specs=pl.BlockSpec((tb, width), lambda i: (i, 0)),
        ),
        compiler_params=pltpu.CompilerParams(
            dimension_semantics=("parallel",),
            vmem_limit_bytes=vmem_limit,
        ),
        cost_estimate=cost,
    )(x, w_c, b_c)

    return out[:, :GH]   # drop gate / pad lanes (kernel store stays lane-dense)


def _reference(x, gate_w, gate_b, expert_w, expert_b,
               num_groups, experts_per_group, hidden_size):
    # Pure-JAX reference mirroring the PyTorch forward (unfused).
    hp = jax.lax.Precision.HIGHEST
    logits = jnp.dot(x, gate_w, precision=hp) + gate_b[None, :]
    gate = jax.nn.softmax(logits, axis=1)
    group_outs = []
    for g in range(num_groups):
        acc = 0.0
        for e in range(experts_per_group):
            idx = g * experts_per_group + e
            acc = acc + (jnp.dot(x, expert_w[idx], precision=hp)
                         + expert_b[idx][None, :])
        group_outs.append(acc)
    expert_out = jnp.concatenate(group_outs, axis=-1)                  # (B, G*H)
    return jnp.sum(gate[:, :, None] * expert_out[:, None, :], axis=1)


if __name__ == "__main__":
    # Small shapes consistent with the module's forward.
    B = 8
    input_size = 32
    hidden_size = 16
    num_groups = 2
    experts_per_group = 2
    num_experts = num_groups * experts_per_group

    key = jax.random.PRNGKey(0)
    kx, kgw, kgb, kew, keb = jax.random.split(key, 5)

    x = jax.random.normal(kx, (B, input_size), dtype=jnp.float32)

    # PyTorch nn.Linear-style init bound (uniform +-1/sqrt(fan_in)), deterministic.
    bound = 1.0 / (input_size ** 0.5)
    gate_w = jax.random.uniform(kgw, (input_size, num_experts),
                                minval=-bound, maxval=bound, dtype=jnp.float32)
    gate_b = jax.random.uniform(kgb, (num_experts,),
                                minval=-bound, maxval=bound, dtype=jnp.float32)
    expert_w = jax.random.uniform(kew, (num_experts, input_size, hidden_size),
                                  minval=-bound, maxval=bound, dtype=jnp.float32)
    expert_b = jax.random.uniform(keb, (num_experts, hidden_size),
                                  minval=-bound, maxval=bound, dtype=jnp.float32)

    # Parameter-load-time fusion (runs once, off the per-forward path).
    w_c, b_c = prepare_fused_params(
        gate_w, gate_b, expert_w, expert_b,
        num_groups=num_groups, experts_per_group=experts_per_group,
        hidden_size=hidden_size)
    w_c, b_c = jax.block_until_ready((w_c, b_c))

    out = nested_moe_forward(
        x, w_c, b_c,
        num_groups=num_groups,
        experts_per_group=experts_per_group,
        hidden_size=hidden_size,
    )
    out = jax.block_until_ready(out)

    ref = _reference(x, gate_w, gate_b, expert_w, expert_b,
                     num_groups, experts_per_group, hidden_size)
    assert out.shape == (B, num_groups * hidden_size)
    assert jnp.allclose(out, ref, atol=1e-5, rtol=1e-5), "mismatch vs reference"

    print("KERNEL_OK")
</pallas_src>

<mosaic_0001>
module attributes {stable_mosaic.version = 11 : i64} {
  func.func @_moe_kernel(%arg0: i32, %arg1: memref<8x32xf32, #tpu.memory_space<vmem>>, %arg2: memref<32x128xf32, #tpu.memory_space<vmem>>, %arg3: memref<1x128xf32, #tpu.memory_space<vmem>>, %arg4: memref<8x128xf32, #tpu.memory_space<vmem>>) attributes {dimension_semantics = [#tpu.dimension_semantics<parallel>], iteration_bounds = array<i64: 1>, scalar_prefetch = 0 : i64, scratch_operands = 0 : i64, tpu.core_type = #tpu.core_type<tc>, window_params = [{transform_indices = @transform_0, window_bounds = array<i64: 8, 32>}, {pipeline_mode = #tpu.pipeline_mode<synchronous>, transform_indices = @transform_1, window_bounds = array<i64: 32, 128>}, {pipeline_mode = #tpu.pipeline_mode<synchronous>, transform_indices = @transform_2, window_bounds = array<i64: 1, 128>}, {transform_indices = @transform_3, window_bounds = array<i64: 8, 128>}]} {
    %c0 = arith.constant 0 : index
    %c0_0 = arith.constant 0 : index
    %0 = vector.load %arg1[%c0, %c0_0] : memref<8x32xf32, #tpu.memory_space<vmem>>, vector<8x32xf32>
    %c0_1 = arith.constant 0 : index
    %c0_2 = arith.constant 0 : index
    %1 = vector.load %arg2[%c0_1, %c0_2] : memref<32x128xf32, #tpu.memory_space<vmem>>, vector<32x128xf32>
    %cst = arith.constant dense<0.000000e+00> : vector<8x128xf32>
    %2 = tpu.matmul %0, %1, %cst {dimension_numbers = #tpu.dot_dimension_numbers<[1], [0], [0], [1], [0, 0, 1, 1], [], []>} : vector<8x32xf32>, vector<32x128xf32>, vector<8x128xf32> -> vector<8x128xf32>
    %c0_3 = arith.constant 0 : index
    %c0_4 = arith.constant 0 : index
    %3 = vector.load %arg3[%c0_3, %c0_4] : memref<1x128xf32, #tpu.memory_space<vmem>>, vector<1x128xf32>
    %4 = vector.broadcast %3 : vector<1x128xf32> to vector<8x128xf32>
    %5 = arith.addf %2, %4 : vector<8x128xf32>
    %6 = tpu.iota {dimensions = array<i32: 1>} : vector<8x128xi32>
    %c32_i32 = arith.constant 32 : i32
    %7 = vector.broadcast %c32_i32 : i32 to vector<8x128xi32>
    %8 = arith.cmpi sge, %6, %7 : vector<8x128xi32>
    %c36_i32 = arith.constant 36 : i32
    %9 = vector.broadcast %c36_i32 : i32 to vector<8x128xi32>
    %10 = arith.cmpi slt, %6, %9 : vector<8x128xi32>
    %11 = arith.andi %8, %10 : vector<8x128xi1>
    %cst_5 = arith.constant 0xFF800000 : f32
    %12 = vector.broadcast %cst_5 : f32 to vector<8x128xf32>
    %13 = arith.select %11, %5, %12 : vector<8x128xi1>, vector<8x128xf32>
    %cst_6 = arith.constant dense<0xFF800000> : vector<8xf32>
    %14 = vector.multi_reduction <maximumf>, %13, %cst_6 [1] : vector<8x128xf32> to vector<8xf32>
    %15 = vector.shape_cast %14 : vector<8xf32> to vector<8x1xf32>
    %16 = vector.broadcast %15 : vector<8x1xf32> to vector<8x128xf32>
    %17 = arith.subf %5, %16 : vector<8x128xf32>
    %cst_7 = arith.constant 0xFF800000 : f32
    %18 = vector.broadcast %cst_7 : f32 to vector<8x128xf32>
    %19 = arith.select %11, %17, %18 : vector<8x128xi1>, vector<8x128xf32>
    %20 = math.exp %19 : vector<8x128xf32>
    %cst_8 = arith.constant dense<0.000000e+00> : vector<8xf32>
    %21 = vector.multi_reduction <add>, %20, %cst_8 [1] : vector<8x128xf32> to vector<8xf32>
    %22 = vector.shape_cast %21 : vector<8xf32> to vector<8x1xf32>
    %23 = tpu.reciprocal %22 : vector<8x1xf32> -> vector<8x1xf32>
    %24 = arith.mulf %22, %23 : vector<8x1xf32>
    %25 = vector.broadcast %24 : vector<8x1xf32> to vector<8x128xf32>
    %26 = arith.mulf %25, %5 : vector<8x128xf32>
    %c0_9 = arith.constant 0 : index
    %c0_10 = arith.constant 0 : index
    %27 = vector.load %arg4[%c0_9, %c0_10] : memref<8x128xf32, #tpu.memory_space<vmem>>, vector<8x128xf32>
    tpu.vector_store %arg4[%c0_9, %c0_10], %26 {strides = array<i32>} : memref<8x128xf32, #tpu.memory_space<vmem>>, vector<8x128xf32>,
    return
  }
  func.func @transform_0(%arg0: i32) -> (i32, i32) {
    %c0_i32 = arith.constant 0 : i32
    %c0_i32_0 = arith.constant 0 : i32
    return %arg0, %c0_i32 : i32, i32
  }
  func.func @transform_1(%arg0: i32) -> (i32, i32) {
    %c0_i32 = arith.constant 0 : i32
    %c0_i32_0 = arith.constant 0 : i32
    %c0_i32_1 = arith.constant 0 : i32
    return %c0_i32, %c0_i32_0 : i32, i32
  }
  func.func @transform_2(%arg0: i32) -> (i32, i32) {
    %c0_i32 = arith.constant 0 : i32
    %c0_i32_0 = arith.constant 0 : i32
    %c0_i32_1 = arith.constant 0 : i32
    return %c0_i32, %c0_i32_0 : i32, i32
  }
  func.func @transform_3(%arg0: i32) -> (i32, i32) {
    %c0_i32 = arith.constant 0 : i32
    %c0_i32_0 = arith.constant 0 : i32
    return %arg0, %c0_i32 : i32, i32
  }
}

</mosaic_0001>

<llo_original>
// kernel: tpu_custom_call.1
$region0: #{tpu_custom_call.1}
  #allocation0 [shape = 'u32[]', space=smem, size = 0x4, offset = 0x4, fixed_abs, tag = 'smem constant byte address 0x4 - core index']
  #allocation1 [shape = 'u32[144,128]{1,0:T(1,128)}', space=vmem, size = 0x12000, scoped, tag = 'internal scratch']
  %s0 = inlined_call_operand.hbm [shape: f32[8,32], index: 0, kind: input, shape index: {}]
  %s1 = inlined_call_operand.hbm [shape: f32[32,128], index: 1, kind: input, shape index: {}]
  %s2 = inlined_call_operand.vmem [shape: f32[1,128], index: 2, kind: input, shape index: {}]
  %s3 = inlined_call_operand.hbm [shape: f32[8,128], index: 3, kind: output, shape index: {}]
  %s4 = sld [smem:[#allocation0]]
  $region30: #{tpu_custom_call.1} parent=0
    _
  %s6 = ssub.s32 1, %s4
  %s7 = scalar_select 0, %s6, %s4
  $region1: #{tpu_custom_call.1} parent=0
    #allocation2 [shape = 'u8[4096]{0}', space=vmem, size = 0x1000, scoped, tag = 'input window, operand 0, single buffered']
    #allocation3 [shape = 's32[1]{0}', space=sflag, size = 0x4, scoped, tag = 'scoped memory for tpu_custom_call.1']
    #allocation4 [shape = 's32[1]{0}', space=sflag, size = 0x4, scoped, tag = 'scoped memory for tpu_custom_call.1']
    #allocation5 [shape = 'u8[16384]{0}', space=vmem, size = 0x4000, scoped, tag = 'input window, operand 1, single buffered']
    #allocation6 [shape = 's32[1]{0}', space=sflag, size = 0x4, scoped, tag = 'scoped memory for tpu_custom_call.1']
    #allocation7 [shape = 'u8[4096]{0}', space=vmem, size = 0x1000, scoped, tag = 'output window, operand 0, single buffered']
    %8 = vsyncpa [#allocation3], 0
    %9 = vsyncpa [#allocation6], 0
    %10 = vsyncpa [#allocation4], 0
    // Predicated region
    $region2: #{tpu_custom_call.1} parent=1 // pred_check
      _
    $region3: #{tpu_custom_call.1} parent=1 // pred_check_branch
      %12 = sbr.rel (0) target = $region5
    $region4: #{tpu_custom_call.1} parent=1 // pred_region
      %s14 = ssub.s32 128, 128
      %15 = vsyncadd [#allocation3], %s14
      %s17 = sshll.u32 [#allocation2], 4
      %s18 = int_to_ptr.vmem [resolvable:$true] %s17
      %20 = dma.hbm_to_vmem [thread:$0]  %s0, 128, %s18, [#allocation3]
    $region5: #{tpu_custom_call.1} parent=1 // pred_fallthru
      _
    // Predicated region
    $region6: #{tpu_custom_call.1} parent=1 // pred_check
      _
    $region7: #{tpu_custom_call.1} parent=1 // pred_check_branch
      %22 = sbr.rel (0) target = $region9
    $region8: #{tpu_custom_call.1} parent=1 // pred_region
      %s24 = ssub.s32 512, 512
      %25 = vsyncadd [#allocation6], %s24
      %s26 = sshll.u32 [#allocation5], 4
      %s27 = int_to_ptr.vmem [resolvable:$true] %s26
      %32 = dma.hbm_to_vmem [thread:$0]  %s1, 512, %s27, [#allocation6], 128, 128, 8
    $region9: #{tpu_custom_call.1} parent=1 // pred_fallthru
      _
    // Predicated region
    $region10: #{tpu_custom_call.1} parent=1 // pred_check
      _
    $region11: #{tpu_custom_call.1} parent=1 // pred_check_branch
      %34 = sbr.rel (0) target = $region13
    $region12: #{tpu_custom_call.1} parent=1 // pred_region
      _
    $region13: #{tpu_custom_call.1} parent=1 // pred_fallthru
      _
    // Predicated region
    $region14: #{tpu_custom_call.1} parent=1 // pred_check
      _
    $region15: #{tpu_custom_call.1} parent=1 // pred_check_branch
      %36 = sbr.rel (0) target = $region17
    $region16: #{tpu_custom_call.1} parent=1 // pred_region
      %37 = dma.done [#allocation3], 128
    $region17: #{tpu_custom_call.1} parent=1 // pred_fallthru
      _
    // Predicated region
    $region18: #{tpu_custom_call.1} parent=1 // pred_check
      _
    $region19: #{tpu_custom_call.1} parent=1 // pred_check_branch
      %39 = sbr.rel (0) target = $region21
    $region20: #{tpu_custom_call.1} parent=1 // pred_region
      %40 = dma.done [#allocation6], 512
    $region21: #{tpu_custom_call.1} parent=1 // pred_fallthru
      _
    %v41 = vld [vmem:[#allocation2] sm:$0xff]
    %v42 = vld [vmem:[#allocation5] sm:$0xff]
    %v43 = vld [vmem:[#allocation5 + $0x8] sm:$0xff]
    %v44 = vld [vmem:[#allocation5 + $0x10] sm:$0xff]
    %v45 = vld [vmem:[#allocation5 + $0x18] sm:$0xff]
    %v46 = vld [vmem:[%s2] sm:$0x1]
    %v48 = vlaneseq
    %v49 = vshrl.u32 %v48, 7
    %v50 = vsub.s32 0, %v49
    %v51 = vrot.slane %v46, %v50
    %vm53 = vcmask 261120
    %v55 = vsel %vm53, %v41, 0
    %57 = vmatprep.subr.mxu0 0.0
    %58 = vmatpush1.msra.mxu0 %v42
    %59 = vmatprep.subr.mxu0 0.0
    %60 = vmatpush1.msra.mxu0 %v43
    %61 = vmatprep.subr.mxu0 0.0
    %62 = vmatpush1.msra.mxu0 %v44
    %63 = vmatprep.subr.mxu0 0.0
    %64 = vmatpush1.msra.mxu0 %v45
    %65 = vmatprep.subr.mxu0 0.0
    %66 = vmatpush1.msra.mxu0 0.0
    %67 = vmatprep.subr.mxu0 0.0
    %68 = vmatpush1.msra.mxu0 0.0
    %69 = vmatprep.subr.mxu0 0.0
    %70 = vmatpush1.msra.mxu0 0.0
    %71 = vmatprep.subr.mxu0 0.0
    %72 = vmatpush1.msra.mxu0 0.0
    %73 = vmatprep.subr.mxu0 0.0
    %74 = vmatpush1.msra.mxu0 0.0
    %75 = vmatprep.subr.mxu0 0.0
    %76 = vmatpush1.msra.mxu0 0.0
    %77 = vmatprep.subr.mxu0 0.0
    %78 = vmatpush1.msra.mxu0 0.0
    %79 = vmatprep.subr.mxu0 0.0
    %80 = vmatpush1.msra.mxu0 0.0
    %81 = vmatprep.subr.mxu0 0.0
    %82 = vmatpush1.msra.mxu0 0.0
    %83 = vmatprep.subr.mxu0 0.0
    %84 = vmatpush1.msra.mxu0 0.0
    %85 = vmatprep.subr.mxu0 0.0
    %86 = vmatpush1.msra.mxu0 0.0
    %87 = vmatprep.subr.mxu0 0.0
    %88 = vmatpush1.msra.mxu0 0.0
    %89 = vmatprep.subr.mxu0 0.0
    %90 = vmatpush1.msra.mxu0 0.0
    %91 = vmatprep.subr.mxu0 0.0
    %92 = vmatpush1.msra.mxu0 0.0
    %93 = vmatprep.subr.mxu0 0.0
    %94 = vmatpush1.msra.mxu0 0.0
    %95 = vmatprep.subr.mxu0 0.0
    %96 = vmatpush1.msra.mxu0 0.0
    %97 = vmatprep.subr.mxu0 0.0
    %98 = vmatpush1.msra.mxu0 0.0
    %99 = vmatprep.subr.mxu0 0.0
    %100 = vmatpush1.msra.mxu0 0.0
    %101 = vmatprep.subr.mxu0 0.0
    %102 = vmatpush1.msra.mxu0 0.0
    %103 = vmatprep.subr.mxu0 0.0
    %104 = vmatpush1.msra.mxu0 0.0
    %105 = vmatprep.subr.mxu0 0.0
    %106 = vmatpush1.msra.mxu0 0.0
    %107 = vmatprep.subr.mxu0 0.0
    %108 = vmatpush1.msra.mxu0 0.0
    %109 = vmatprep.subr.mxu0 0.0
    %110 = vmatpush1.msra.mxu0 0.0
    %111 = vmatprep.subr.mxu0 0.0
    %112 = vmatpush1.msra.mxu0 0.0
    %113 = vmatprep.subr.mxu0 0.0
    %114 = vmatpush1.msra.mxu0 0.0
    %115 = vmatprep.subr.mxu0 0.0
    %116 = vmatpush1.msra.mxu0 0.0
    %117 = vmatprep.subr.mxu0 0.0
    %118 = vmatpush1.msra.mxu0 0.0
    %119 = vmatprep.subr.mxu0 0.0
    %120 = vmatpush1.msra.mxu0 0.0
    %121 = vmatprep.mubr.f32.mxu0 0.0
    %122 = vmatmul.mubr.f32.gmra.mrb[0].mxu0 %v55
    %v123 = vpop.f32.mrb[0].mxu0
    %v124 = vadd.f32 %v51, %v123
    %v125 = vpop.f32.mrb[0].mxu0
    %126 = vdwg.mxu0
    %v127 = vlaneseq
    %v128 = vand.u32 %v127, 127
    %vm129 = vcmp.ge.s32.totalorder %v128, 32
    %vm130 = vcmp.lt.s32.totalorder %v128, 36
    %vm131 = vmand %vm129, %vm130
    %v132 = vsel %vm131, %v124, -inf
    %133 = vmax.xlane.f32.xlu0 %v132
    %v134 = vpop.xlane.xlu0 %133
    %v135 = vsub.f32 %v124, %v134
    %v136 = vsel %vm131, %v135, -inf
    %v137 = vmul.f32 %v136, 1.442695
    %v138 = vpow.pop %v137
    %139 = vadd.xlane.f32.xlu0 %v138
    %v140 = vpop.xlane.xlu0 %139
    %v141 = vrcp.pop %v140
    %v142 = vmul.f32 %v140, %v141
    %v143 = vmul.f32 %v142, %v124
    %144 = vst [vmem:[#allocation7] sm:$0xff] %v143
    // Predicated region
    $region22: #{tpu_custom_call.1} parent=1 // pred_check
      _
    $region23: #{tpu_custom_call.1} parent=1 // pred_check_branch
      %146 = sbr.rel (0) target = $region25
    $region24: #{tpu_custom_call.1} parent=1 // pred_region
      %s148 = ssub.s32 128, 128
      %149 = vsyncadd [#allocation4], %s148
      %s151 = sshll.u32 [#allocation7], 4
      %s152 = int_to_ptr.vmem [resolvable:$true] %s151
      %154 = dma.vmem_to_hbm [thread:$0]  %s152, 128, %s3, [#allocation4]
    $region25: #{tpu_custom_call.1} parent=1 // pred_fallthru
      _
    // Predicated region
    $region26: #{tpu_custom_call.1} parent=1 // pred_check
      _
    $region27: #{tpu_custom_call.1} parent=1 // pred_check_branch
      %156 = sbr.rel (0) target = $region29
    $region28: #{tpu_custom_call.1} parent=1 // pred_region
      %157 = dma.done [#allocation4], 128
    $region29: #{tpu_custom_call.1} parent=1 // pred_fallthru
      _
    %158 = vsyncpa [#allocation3], 1
    %159 = vsyncpa [#allocation6], 1
    %160 = vsyncpa [#allocation4], 1

</llo_original>
